<compile_context>
chip_gen: v6e
topology: v6e:2x2x1
jax: 0.10.0
libtpu: 0.0.40
codegen_flags: <defaults>
</compile_context>

<pallas_src>
import functools

import jax
import jax.numpy as jnp
from jax.experimental import pallas as pl
from jax.experimental.pallas import tpu as pltpu


def _round_up(n: int, m: int) -> int:
    return ((n + m - 1) // m) * m


def mlp_kernel(x_ref, w1_ref, b1_ref, w2_ref, b2_ref, o_ref):
    # x_ref/w1_ref/w2_ref are bf16; biases and matmul accumulators are f32.
    x = x_ref[...]                                                     # (TB, Kp) bf16
    h = jnp.dot(x, w1_ref[...], preferred_element_type=jnp.float32)    # MXU, f32 acc
    h = jax.nn.sigmoid(h + b1_ref[...])                                # VPU + EUP, f32
    y = jnp.dot(h.astype(jnp.bfloat16), w2_ref[...],
                preferred_element_type=jnp.float32)                    # MXU, f32 acc
    o_ref[...] = (y + b2_ref[...]).astype(o_ref.dtype)


@functools.partial(jax.jit, static_argnames=("block_b",))
def mlp_forward(x, w1, b1, w2, b2, *, block_b: int = 256):
    """sigmoid(x @ w1 + b1) @ w2 + b2, fused in one Pallas kernel."""
    B, D_in = x.shape
    H = w1.shape[1]
    D_out = w2.shape[1]
    out_dtype = x.dtype

    # ---- pad to MXU / lane-friendly shapes (zero pads are semantically neutral) ----
    Kp = _round_up(D_in, 128)
    Hp = _round_up(H, 128)
    Np = _round_up(D_out, 128)
    TB = min(block_b, _round_up(B, 8))        # batch tile (sublane multiple)
    Bp = _round_up(B, TB)

    x_p = jnp.pad(x, ((0, Bp - B), (0, Kp - D_in))).astype(jnp.bfloat16)
    w1_p = jnp.pad(w1, ((0, Kp - D_in), (0, Hp - H))).astype(jnp.bfloat16)
    b1_p = jnp.pad(b1, ((0, 0), (0, Hp - H))).astype(jnp.float32)
    w2_p = jnp.pad(w2, ((0, Hp - H), (0, Np - D_out))).astype(jnp.bfloat16)
    b2_p = jnp.pad(b2, ((0, 0), (0, Np - D_out))).astype(jnp.float32)

    grid = (Bp // TB,)

    # ---- VMEM budget (batch tiles double-buffered; weights single-resident) ----
    bytes_tiles = 2 * ((TB * Kp * 2) + (TB * Np * jnp.dtype(out_dtype).itemsize))
    bytes_weights = (Kp * Hp * 2) + (Hp * Np * 2) + (Hp * 4) + (Np * 4)
    vmem_needed = bytes_tiles + 2 * bytes_weights + (2 << 20)
    vmem_limit = int(min(max(vmem_needed, 32 * 1024 * 1024), 64 * 1024 * 1024))
    # TODO(synk): if bf16 weights ever exceed ~40-48 MiB (v7x has 64 MiB VMEM/TC),
    # add a K/H-tiling grid axis ("arbitrary") with an f32 VMEM accumulator
    # instead of holding both weight matrices resident.

    cost = pl.CostEstimate(
        flops=2 * B * (D_in * H + H * D_out),
        transcendentals=B * H,
        bytes_accessed=(x_p.size * 2 + w1_p.size * 2 + w2_p.size * 2
                        + b1_p.size * 4 + b2_p.size * 4
                        + Bp * Np * jnp.dtype(out_dtype).itemsize),
    )

    out_p = pl.pallas_call(
        mlp_kernel,
        out_shape=jax.ShapeDtypeStruct((Bp, Np), out_dtype),
        grid=grid,
        in_specs=[
            pl.BlockSpec((TB, Kp), lambda i: (i, 0)),   # x : batch-tiled
            pl.BlockSpec((Kp, Hp), lambda i: (0, 0)),   # w1: resident
            pl.BlockSpec((1, Hp), lambda i: (0, 0)),    # b1: resident
            pl.BlockSpec((Hp, Np), lambda i: (0, 0)),   # w2: resident
            pl.BlockSpec((1, Np), lambda i: (0, 0)),    # b2: resident
        ],
        out_specs=pl.BlockSpec((TB, Np), lambda i: (i, 0)),
        compiler_params=pltpu.CompilerParams(
            dimension_semantics=("parallel",),          # batch tiles independent
            vmem_limit_bytes=vmem_limit,
        ),
        cost_estimate=cost,
    )(x_p, w1_p, b1_p, w2_p, b2_p)

    return out_p[:B, :D_out]


def init_params(key, input_dim, hidden_dim, output_dim, dtype=jnp.float32):
    # Deterministic init mimicking nn.Linear's U(-1/sqrt(fan_in), 1/sqrt(fan_in)).
    k1, k2, k3, k4 = jax.random.split(key, 4)
    lim1 = 1.0 / (input_dim ** 0.5)
    lim2 = 1.0 / (hidden_dim ** 0.5)
    w1 = jax.random.uniform(k1, (input_dim, hidden_dim), dtype, -lim1, lim1)
    b1 = jax.random.uniform(k2, (1, hidden_dim), dtype, -lim1, lim1)
    w2 = jax.random.uniform(k3, (hidden_dim, output_dim), dtype, -lim2, lim2)
    b2 = jax.random.uniform(k4, (1, output_dim), dtype, -lim2, lim2)
    return w1, b1, w2, b2


if __name__ == "__main__":
    batch, input_dim, hidden_dim, output_dim = 8, 16, 32, 8

    key = jax.random.PRNGKey(0)
    kx, kp = jax.random.split(key)
    x = jax.random.normal(kx, (batch, input_dim), jnp.float32)
    w1, b1, w2, b2 = init_params(kp, input_dim, hidden_dim, output_dim)

    out = mlp_forward(x, w1, b1, w2, b2)
    jax.block_until_ready(out)

    # Pure-JAX reference mirroring the kernel's bf16-operand / f32-accumulate policy.
    xb = x.astype(jnp.bfloat16).astype(jnp.float32)
    w1b = w1.astype(jnp.bfloat16).astype(jnp.float32)
    w2b = w2.astype(jnp.bfloat16).astype(jnp.float32)
    h = jax.nn.sigmoid(xb @ w1b + b1)
    ref = h.astype(jnp.bfloat16).astype(jnp.float32) @ w2b + b2

    assert out.shape == (batch, output_dim)
    assert jnp.allclose(out, ref, atol=5e-3, rtol=5e-3), float(jnp.max(jnp.abs(out - ref)))

    print("KERNEL_OK")
</pallas_src>

<mosaic_0001>
module attributes {stable_mosaic.version = 11 : i64} {
  func.func @mlp_kernel(%arg0: i32, %arg1: memref<8x128xbf16, #tpu.memory_space<vmem>>, %arg2: memref<128x128xbf16, #tpu.memory_space<vmem>>, %arg3: memref<1x128xf32, #tpu.memory_space<vmem>>, %arg4: memref<128x128xbf16, #tpu.memory_space<vmem>>, %arg5: memref<1x128xf32, #tpu.memory_space<vmem>>, %arg6: memref<8x128xf32, #tpu.memory_space<vmem>>) attributes {dimension_semantics = [#tpu.dimension_semantics<parallel>], iteration_bounds = array<i64: 1>, scalar_prefetch = 0 : i64, scratch_operands = 0 : i64, tpu.core_type = #tpu.core_type<tc>, window_params = [{transform_indices = @transform_0, window_bounds = array<i64: 8, 128>}, {pipeline_mode = #tpu.pipeline_mode<synchronous>, transform_indices = @transform_1, window_bounds = array<i64: 128, 128>}, {pipeline_mode = #tpu.pipeline_mode<synchronous>, transform_indices = @transform_2, window_bounds = array<i64: 1, 128>}, {pipeline_mode = #tpu.pipeline_mode<synchronous>, transform_indices = @transform_3, window_bounds = array<i64: 128, 128>}, {pipeline_mode = #tpu.pipeline_mode<synchronous>, transform_indices = @transform_4, window_bounds = array<i64: 1, 128>}, {transform_indices = @transform_5, window_bounds = array<i64: 8, 128>}]} {
    %c0 = arith.constant 0 : index
    %c0_0 = arith.constant 0 : index
    %0 = vector.load %arg1[%c0, %c0_0] : memref<8x128xbf16, #tpu.memory_space<vmem>>, vector<8x128xbf16>
    %c0_1 = arith.constant 0 : index
    %c0_2 = arith.constant 0 : index
    %1 = vector.load %arg2[%c0_1, %c0_2] : memref<128x128xbf16, #tpu.memory_space<vmem>>, vector<128x128xbf16>
    %cst = arith.constant dense<0.000000e+00> : vector<8x128xf32>
    %2 = tpu.matmul %0, %1, %cst {dimension_numbers = #tpu.dot_dimension_numbers<[1], [0], [0], [1], [0, 0, 1, 1], [], []>} : vector<8x128xbf16>, vector<128x128xbf16>, vector<8x128xf32> -> vector<8x128xf32>
    %c0_3 = arith.constant 0 : index
    %c0_4 = arith.constant 0 : index
    %3 = vector.load %arg3[%c0_3, %c0_4] : memref<1x128xf32, #tpu.memory_space<vmem>>, vector<1x128xf32>
    %4 = vector.broadcast %3 : vector<1x128xf32> to vector<8x128xf32>
    %5 = arith.addf %2, %4 : vector<8x128xf32>
    %6 = arith.negf %5 : vector<8x128xf32>
    %7 = math.exp %6 : vector<8x128xf32>
    %cst_5 = arith.constant 1.000000e+00 : f32
    %8 = vector.broadcast %cst_5 : f32 to vector<8x128xf32>
    %9 = arith.addf %8, %7 : vector<8x128xf32>
    %10 = arith.divf %8, %9 : vector<8x128xf32>
    %11 = arith.truncf %10 : vector<8x128xf32> to vector<8x128xbf16>
    %c0_6 = arith.constant 0 : index
    %c0_7 = arith.constant 0 : index
    %12 = vector.load %arg4[%c0_6, %c0_7] : memref<128x128xbf16, #tpu.memory_space<vmem>>, vector<128x128xbf16>
    %cst_8 = arith.constant dense<0.000000e+00> : vector<8x128xf32>
    %13 = tpu.matmul %11, %12, %cst_8 {dimension_numbers = #tpu.dot_dimension_numbers<[1], [0], [0], [1], [0, 0, 1, 1], [], []>} : vector<8x128xbf16>, vector<128x128xbf16>, vector<8x128xf32> -> vector<8x128xf32>
    %c0_9 = arith.constant 0 : index
    %c0_10 = arith.constant 0 : index
    %14 = vector.load %arg5[%c0_9, %c0_10] : memref<1x128xf32, #tpu.memory_space<vmem>>, vector<1x128xf32>
    %15 = vector.broadcast %14 : vector<1x128xf32> to vector<8x128xf32>
    %16 = arith.addf %13, %15 : vector<8x128xf32>
    %c0_11 = arith.constant 0 : index
    %c0_12 = arith.constant 0 : index
    %17 = vector.load %arg6[%c0_11, %c0_12] : memref<8x128xf32, #tpu.memory_space<vmem>>, vector<8x128xf32>
    tpu.vector_store %arg6[%c0_11, %c0_12], %16 {strides = array<i32>} : memref<8x128xf32, #tpu.memory_space<vmem>>, vector<8x128xf32>,
    return
  }
  func.func @transform_0(%arg0: i32) -> (i32, i32) {
    %c0_i32 = arith.constant 0 : i32
    %c0_i32_0 = arith.constant 0 : i32
    return %arg0, %c0_i32 : i32, i32
  }
  func.func @transform_1(%arg0: i32) -> (i32, i32) {
    %c0_i32 = arith.constant 0 : i32
    %c0_i32_0 = arith.constant 0 : i32
    %c0_i32_1 = arith.constant 0 : i32
    return %c0_i32, %c0_i32_0 : i32, i32
  }
  func.func @transform_2(%arg0: i32) -> (i32, i32) {
    %c0_i32 = arith.constant 0 : i32
    %c0_i32_0 = arith.constant 0 : i32
    %c0_i32_1 = arith.constant 0 : i32
    return %c0_i32, %c0_i32_0 : i32, i32
  }
  func.func @transform_3(%arg0: i32) -> (i32, i32) {
    %c0_i32 = arith.constant 0 : i32
    %c0_i32_0 = arith.constant 0 : i32
    %c0_i32_1 = arith.constant 0 : i32
    return %c0_i32, %c0_i32_0 : i32, i32
  }
  func.func @transform_4(%arg0: i32) -> (i32, i32) {
    %c0_i32 = arith.constant 0 : i32
    %c0_i32_0 = arith.constant 0 : i32
    %c0_i32_1 = arith.constant 0 : i32
    return %c0_i32, %c0_i32_0 : i32, i32
  }
  func.func @transform_5(%arg0: i32) -> (i32, i32) {
    %c0_i32 = arith.constant 0 : i32
    %c0_i32_0 = arith.constant 0 : i32
    return %arg0, %c0_i32 : i32, i32
  }
}

</mosaic_0001>

<llo_original>
// kernel: mlp_forward.1
$region0: #{mlp_forward.1}
  #allocation0 [shape = 'u32[]', space=smem, size = 0x4, offset = 0x4, fixed_abs, tag = 'smem constant byte address 0x4 - core index']
  #allocation1 [shape = 'u32[144,128]{1,0:T(1,128)}', space=vmem, size = 0x12000, scoped, tag = 'internal scratch']
  %s0 = inlined_call_operand.vmem [shape: bf16[8,128], index: 0, kind: input, shape index: {}]
  %s1 = inlined_call_operand.vmem [shape: bf16[128,128], index: 1, kind: input, shape index: {}]
  %s2 = inlined_call_operand.vmem [shape: f32[1,128], index: 2, kind: input, shape index: {}]
  %s3 = inlined_call_operand.vmem [shape: bf16[128,128], index: 3, kind: input, shape index: {}]
  %s4 = inlined_call_operand.vmem [shape: f32[1,128], index: 4, kind: input, shape index: {}]
  %s5 = inlined_call_operand.hbm [shape: f32[8,128], index: 5, kind: output, shape index: {}]
  %s6 = sld [smem:[#allocation0]]
  $region30: #{mlp_forward.1} parent=0
    _
  %s8 = ssub.s32 1, %s6
  %s9 = scalar_select 0, %s8, %s6
  $region1: #{mlp_forward.1} parent=0
    #allocation2 [shape = 'u8[4096]{0}', space=vmem, size = 0x1000, scoped, tag = 'output window, operand 0, single buffered']
    #allocation3 [shape = 's32[1]{0}', space=sflag, size = 0x4, scoped, tag = 'scoped memory for mlp_forward.1']
    %10 = vsyncpa [#allocation3], 0
    // Predicated region
    $region2: #{mlp_forward.1} parent=1 // pred_check
      _
    $region3: #{mlp_forward.1} parent=1 // pred_check_branch
      %12 = sbr.rel (0) target = $region5
    $region4: #{mlp_forward.1} parent=1 // pred_region
      _
    $region5: #{mlp_forward.1} parent=1 // pred_fallthru
      _
    // Predicated region
    $region6: #{mlp_forward.1} parent=1 // pred_check
      _
    $region7: #{mlp_forward.1} parent=1 // pred_check_branch
      %14 = sbr.rel (0) target = $region9
    $region8: #{mlp_forward.1} parent=1 // pred_region
      _
    $region9: #{mlp_forward.1} parent=1 // pred_fallthru
      _
    // Predicated region
    $region10: #{mlp_forward.1} parent=1 // pred_check
      _
    $region11: #{mlp_forward.1} parent=1 // pred_check_branch
      %16 = sbr.rel (0) target = $region13
    $region12: #{mlp_forward.1} parent=1 // pred_region
      _
    $region13: #{mlp_forward.1} parent=1 // pred_fallthru
      _
    // Predicated region
    $region14: #{mlp_forward.1} parent=1 // pred_check
      _
    $region15: #{mlp_forward.1} parent=1 // pred_check_branch
      %18 = sbr.rel (0) target = $region17
    $region16: #{mlp_forward.1} parent=1 // pred_region
      _
    $region17: #{mlp_forward.1} parent=1 // pred_fallthru
      _
    // Predicated region
    $region18: #{mlp_forward.1} parent=1 // pred_check
      _
    $region19: #{mlp_forward.1} parent=1 // pred_check_branch
      %20 = sbr.rel (0) target = $region21
    $region20: #{mlp_forward.1} parent=1 // pred_region
      _
    $region21: #{mlp_forward.1} parent=1 // pred_fallthru
      _
    %v22 = vld [vmem:[%s0] sm:$0xf]
    %v23 = vld [vmem:[%s1] sm:$0xf]
    %v24 = vld [vmem:[%s1 + $0x4] sm:$0xf]
    %v25 = vld [vmem:[%s1 + $0x8] sm:$0xf]
    %v26 = vld [vmem:[%s1 + $0xc] sm:$0xf]
    %v27 = vld [vmem:[%s1 + $0x10] sm:$0xf]
    %v28 = vld [vmem:[%s1 + $0x14] sm:$0xf]
    %v29 = vld [vmem:[%s1 + $0x18] sm:$0xf]
    %v30 = vld [vmem:[%s1 + $0x1c] sm:$0xf]
    %v31 = vld [vmem:[%s1 + $0x20] sm:$0xf]
    %v32 = vld [vmem:[%s1 + $0x24] sm:$0xf]
    %v33 = vld [vmem:[%s1 + $0x28] sm:$0xf]
    %v34 = vld [vmem:[%s1 + $0x2c] sm:$0xf]
    %v35 = vld [vmem:[%s1 + $0x30] sm:$0xf]
    %v36 = vld [vmem:[%s1 + $0x34] sm:$0xf]
    %v37 = vld [vmem:[%s1 + $0x38] sm:$0xf]
    %v38 = vld [vmem:[%s1 + $0x3c] sm:$0xf]
    %v39 = vld [vmem:[%s2] sm:$0x1]
    %v41 = vlaneseq
    %v42 = vshrl.u32 %v41, 7
    %v43 = vsub.s32 0, %v42
    %v44 = vrot.slane %v39, %v43
    %v62 = vunpack.c.l.b16 %v23
    %v63 = vunpack.c.l.b16 %v24
    %v64 = vunpack.c.l.b16 %v25
    %v65 = vunpack.c.l.b16 %v26
    %v66 = vunpack.c.l.b16 %v27
    %v67 = vunpack.c.l.b16 %v28
    %v68 = vunpack.c.l.b16 %v29
    %v69 = vunpack.c.l.b16 %v30
    %v70 = vunpack.c.l.b16 %v31
    %v71 = vunpack.c.l.b16 %v32
    %v72 = vunpack.c.l.b16 %v33
    %v73 = vunpack.c.l.b16 %v34
    %v74 = vunpack.c.l.b16 %v35
    %v75 = vunpack.c.l.b16 %v36
    %v76 = vunpack.c.l.b16 %v37
    %v77 = vunpack.c.l.b16 %v38
    %v78 = vpack.c.b16 %v63, %v62
    %v79 = vpack.c.b16 %v65, %v64
    %v80 = vpack.c.b16 %v67, %v66
    %v81 = vpack.c.b16 %v69, %v68
    %v82 = vpack.c.b16 %v71, %v70
    %v83 = vpack.c.b16 %v73, %v72
    %v84 = vpack.c.b16 %v75, %v74
    %v85 = vpack.c.b16 %v77, %v76
    %94 = vmatprep.subr.bf16.mxu0 0
    %95 = vmatpush1.bf16.msra.mxu0 %v85
    %96 = vmatprep.subr.bf16.mxu0 0
    %97 = vmatpush1.bf16.msra.mxu0 %v84
    %98 = vmatprep.subr.bf16.mxu0 0
    %99 = vmatpush1.bf16.msra.mxu0 %v83
    %100 = vmatprep.subr.bf16.mxu0 0
    %101 = vmatpush1.bf16.msra.mxu0 %v82
    %102 = vmatprep.subr.bf16.mxu0 0
    %103 = vmatpush1.bf16.msra.mxu0 %v81
    %104 = vmatprep.subr.bf16.mxu0 0
    %105 = vmatpush1.bf16.msra.mxu0 %v80
    %106 = vmatprep.subr.bf16.mxu0 0
    %107 = vmatpush1.bf16.msra.mxu0 %v79
    %108 = vmatprep.subr.bf16.mxu0 0
    %109 = vmatpush1.bf16.msra.mxu0 %v78
    %110 = vmatprep.subr.bf16.mxu0 0
    %111 = vmatpush2.bf16.msra.mxu0 0
    %112 = vmatprep.subr.bf16.mxu0 0
    %113 = vmatpush2.bf16.msra.mxu0 0
    %114 = vmatprep.subr.bf16.mxu0 0
    %115 = vmatpush2.bf16.msra.mxu0 0
    %116 = vmatprep.subr.bf16.mxu0 0
    %117 = vmatpush2.bf16.msra.mxu0 0
    %118 = vmatprep.subr.bf16.mxu0 0
    %119 = vmatpush2.bf16.msra.mxu0 0
    %120 = vmatprep.subr.bf16.mxu0 0
    %121 = vmatpush2.bf16.msra.mxu0 0
    %122 = vmatprep.subr.bf16.mxu0 0
    %123 = vmatpush2.bf16.msra.mxu0 0
    %124 = vmatprep.subr.bf16.mxu0 0
    %125 = vmatpush2.bf16.msra.mxu0 0
    %126 = vmatprep.mubr.bf16.mxu0 0
    %127 = vmatmul.mubr.bf16.gmra.mxu0 %v22
    %v128 = vpop.f32.mrf.mxu0
    %v129 = vadd.f32 %v44, %v128
    %v130 = vpop.f32.mrf.mxu0
    %v131 = vpop.f32.mrf.mxu0
    %v132 = vpop.f32.mrf.mxu0
    %133 = vdwg.mxu0
    %v134 = vxor.u32 %v129, 2147483648
    %v135 = vmul.f32 %v134, 1.442695
    %v136 = vpow.pop %v135
    %v137 = vadd.f32 %v136, 1.0
    %v138 = vrcp.pop %v137
    %v139 = vmul.f32 1.0, %v138
    %v140 = vpack.c.bf16 %v139, %v139
    %v141 = vld [vmem:[%s3] sm:$0xf]
    %v142 = vld [vmem:[%s3 + $0x4] sm:$0xf]
    %v143 = vld [vmem:[%s3 + $0x8] sm:$0xf]
    %v144 = vld [vmem:[%s3 + $0xc] sm:$0xf]
    %v145 = vld [vmem:[%s3 + $0x10] sm:$0xf]
    %v146 = vld [vmem:[%s3 + $0x14] sm:$0xf]
    %v147 = vld [vmem:[%s3 + $0x18] sm:$0xf]
    %v148 = vld [vmem:[%s3 + $0x1c] sm:$0xf]
    %v149 = vld [vmem:[%s3 + $0x20] sm:$0xf]
    %v150 = vld [vmem:[%s3 + $0x24] sm:$0xf]
    %v151 = vld [vmem:[%s3 + $0x28] sm:$0xf]
    %v152 = vld [vmem:[%s3 + $0x2c] sm:$0xf]
    %v153 = vld [vmem:[%s3 + $0x30] sm:$0xf]
    %v154 = vld [vmem:[%s3 + $0x34] sm:$0xf]
    %v155 = vld [vmem:[%s3 + $0x38] sm:$0xf]
    %v156 = vld [vmem:[%s3 + $0x3c] sm:$0xf]
    %v157 = vld [vmem:[%s4] sm:$0x1]
    %v159 = vlaneseq
    %v160 = vshrl.u32 %v159, 7
    %v161 = vsub.s32 0, %v160
    %v162 = vrot.slane %v157, %v161
    %v180 = vunpack.c.l.b16 %v141
    %v181 = vunpack.c.l.b16 %v142
    %v182 = vunpack.c.l.b16 %v143
    %v183 = vunpack.c.l.b16 %v144
    %v184 = vunpack.c.l.b16 %v145
    %v185 = vunpack.c.l.b16 %v146
    %v186 = vunpack.c.l.b16 %v147
    %v187 = vunpack.c.l.b16 %v148
    %v188 = vunpack.c.l.b16 %v149
    %v189 = vunpack.c.l.b16 %v150
    %v190 = vunpack.c.l.b16 %v151
    %v191 = vunpack.c.l.b16 %v152
    %v192 = vunpack.c.l.b16 %v153
    %v193 = vunpack.c.l.b16 %v154
    %v194 = vunpack.c.l.b16 %v155
    %v195 = vunpack.c.l.b16 %v156
    %v196 = vpack.c.b16 %v181, %v180
    %v197 = vpack.c.b16 %v183, %v182
    %v198 = vpack.c.b16 %v185, %v184
    %v199 = vpack.c.b16 %v187, %v186
    %v200 = vpack.c.b16 %v189, %v188
    %v201 = vpack.c.b16 %v191, %v190
    %v202 = vpack.c.b16 %v193, %v192
    %v203 = vpack.c.b16 %v195, %v194
    %212 = vmatprep.subr.bf16.mxu0 0
    %213 = vmatpush1.bf16.msra.mxu0 %v203
    %214 = vmatprep.subr.bf16.mxu0 0
    %215 = vmatpush1.bf16.msra.mxu0 %v202
    %216 = vmatprep.subr.bf16.mxu0 0
    %217 = vmatpush1.bf16.msra.mxu0 %v201
    %218 = vmatprep.subr.bf16.mxu0 0
    %219 = vmatpush1.bf16.msra.mxu0 %v200
    %220 = vmatprep.subr.bf16.mxu0 0
    %221 = vmatpush1.bf16.msra.mxu0 %v199
    %222 = vmatprep.subr.bf16.mxu0 0
    %223 = vmatpush1.bf16.msra.mxu0 %v198
    %224 = vmatprep.subr.bf16.mxu0 0
    %225 = vmatpush1.bf16.msra.mxu0 %v197
    %226 = vmatprep.subr.bf16.mxu0 0
    %227 = vmatpush1.bf16.msra.mxu0 %v196
    %228 = vmatprep.subr.bf16.mxu0 0
    %229 = vmatpush2.bf16.msra.mxu0 0
    %230 = vmatprep.subr.bf16.mxu0 0
    %231 = vmatpush2.bf16.msra.mxu0 0
    %232 = vmatprep.subr.bf16.mxu0 0
    %233 = vmatpush2.bf16.msra.mxu0 0
    %234 = vmatprep.subr.bf16.mxu0 0
    %235 = vmatpush2.bf16.msra.mxu0 0
    %236 = vmatprep.subr.bf16.mxu0 0
    %237 = vmatpush2.bf16.msra.mxu0 0
    %238 = vmatprep.subr.bf16.mxu0 0
    %239 = vmatpush2.bf16.msra.mxu0 0
    %240 = vmatprep.subr.bf16.mxu0 0
    %241 = vmatpush2.bf16.msra.mxu0 0
    %242 = vmatprep.subr.bf16.mxu0 0
    %243 = vmatpush2.bf16.msra.mxu0 0
    %244 = vmatprep.mubr.bf16.mxu0 0
    %245 = vmatmul.mubr.bf16.gmra.mxu0 %v140
    %v246 = vpop.f32.mrf.mxu0
    %v247 = vadd.f32 %v162, %v246
    %v248 = vpop.f32.mrf.mxu0
    %v249 = vpop.f32.mrf.mxu0
    %v250 = vpop.f32.mrf.mxu0
    %251 = vdwg.mxu0
    %252 = vst [vmem:[#allocation2] sm:$0xff] %v247
    // Predicated region
    $region22: #{mlp_forward.1} parent=1 // pred_check
      _
    $region23: #{mlp_forward.1} parent=1 // pred_check_branch
      %254 = sbr.rel (0) target = $region25
    $region24: #{mlp_forward.1} parent=1 // pred_region
      %s256 = ssub.s32 128, 128
      %257 = vsyncadd [#allocation3], %s256
      %s259 = sshll.u32 [#allocation2], 4
      %s260 = int_to_ptr.vmem [resolvable:$true] %s259
      %262 = dma.vmem_to_hbm [thread:$0]  %s260, 128, %s5, [#allocation3]
    $region25: #{mlp_forward.1} parent=1 // pred_fallthru
      _
    // Predicated region
    $region26: #{mlp_forward.1} parent=1 // pred_check
      _
    $region27: #{mlp_forward.1} parent=1 // pred_check_branch
      %264 = sbr.rel (0) target = $region29
    $region28: #{mlp_forward.1} parent=1 // pred_region
      %265 = dma.done [#allocation3], 128
    $region29: #{mlp_forward.1} parent=1 // pred_fallthru
      _
    %266 = vsyncpa [#allocation3], 1

</llo_original>
